<compile_context>
chip_gen: v7x
topology: tpu7x:2x2x1
jax: 0.10.0
libtpu: 0.0.40
codegen_flags: <defaults>
</compile_context>

<pallas_src>
import functools

import jax
import jax.numpy as jnp
from jax.experimental import pallas as pl
from jax.experimental.pallas import tpu as pltpu


def _rnn_seq_kernel(x_ref, hn_in_ref, wslab_ref, probs_ref, hn_out_ref,
                    carry_ref, *, in_c, hid_c):
    t = pl.program_id(0)

    # Initialize the f32 hidden-state carry from the caller-provided hn.
    @pl.when(t == 0)
    def _():
        carry_ref[...] = hn_in_ref[...].astype(jnp.float32)

    x = x_ref[0].astype(jnp.float32)          # (B, in_c)   current timestep
    h0 = carry_ref[0]                         # (B, hid_c)  f32 carry
    h1 = carry_ref[1]                         # (B, hid_c)  f32 carry

    # Static, 8-aligned row offsets into the packed weight slab.
    r_w1 = in_c + hid_c                       # end of W0 / start of W1
    r_misc = in_c + 3 * hid_c                 # start of misc rows
    w0 = wslab_ref[0:r_w1, :]                 # (in_c+hid_c, hid_c)
    w1 = wslab_ref[r_w1:r_misc, :]            # (2*hid_c,   hid_c)
    misc = wslab_ref[r_misc:r_misc + 4, :].astype(jnp.float32)
    b0 = misc[0:1, :]                         # bih0 + bhh0
    b1 = misc[1:2, :]                         # bih1 + bhh1
    wc = misc[2:3, :]                         # classifier weight row
    bc = misc[3:4, 0:1]                       # classifier bias (scalar)

    # Layer 0: hn0 = tanh([x, h0] @ W0 + b0)     (fused Wih0/Whh0 matmul)
    xh0 = jnp.concatenate([x, h0], axis=-1)
    hn0 = jnp.tanh(jnp.dot(xh0, w0, preferred_element_type=jnp.float32) + b0)

    # Layer 1: hn1 = tanh([hn0, h1] @ W1 + b1)   (fused Wih1/Whh1 matmul)
    xh1 = jnp.concatenate([hn0, h1], axis=-1)
    hn1 = jnp.tanh(jnp.dot(xh1, w1, preferred_element_type=jnp.float32) + b1)

    # Classifier: width-1 matmul done as VPU multiply + lane reduce + sigmoid.
    logit = jnp.sum(hn1 * wc, axis=-1, keepdims=True) + bc        # (B, 1)
    probs_ref[t] = jax.nn.sigmoid(logit).astype(probs_ref.dtype)  # VMEM resident

    # Carry hidden state to the next timestep (stays f32 across the sequence).
    carry_ref[0] = hn0
    carry_ref[1] = hn1

    @pl.when(t == pl.num_programs(0) - 1)
    def _():
        hn_out_ref[...] = carry_ref[...].astype(hn_out_ref.dtype)


def init_params(key, in_c, hid_c, dtype=jnp.float32):
    """Raw parameters, torch.nn.Linear-equivalent, stored transposed (in, out)."""
    ks = jax.random.split(key, 10)

    def lin(kw, kb, fan_in, fan_out):
        bound = 1.0 / jnp.sqrt(fan_in)
        w = jax.random.uniform(kw, (fan_in, fan_out), dtype, -bound, bound)
        b = jax.random.uniform(kb, (1, fan_out), dtype, -bound, bound)
        return w, b

    wih0, bih0 = lin(ks[0], ks[1], in_c, hid_c)
    whh0, bhh0 = lin(ks[2], ks[3], hid_c, hid_c)
    wih1, bih1 = lin(ks[4], ks[5], hid_c, hid_c)
    whh1, bhh1 = lin(ks[6], ks[7], hid_c, hid_c)
    wc, bc = lin(ks[8], ks[9], hid_c, 1)
    return dict(wih0=wih0, bih0=bih0, whh0=whh0, bhh0=bhh0,
                wih1=wih1, bih1=bih1, whh1=whh1, bhh1=bhh1,
                wc=wc, bc=bc)


def pack_params(params, weight_dtype=jnp.float32):
    """One-time packing of every parameter into a single (R, hid_c) slab.

    Row layout:  [0, in_c+hid_c)          -> W0 = [Wih0; Whh0]
                 [in_c+hid_c, in_c+3h)    -> W1 = [Wih1; Whh1]
                 [in_c+3h, in_c+3h+4)     -> b0, b1, wc_row, bc (padded row)
                 remainder                -> zero padding to a multiple of 8.
    Use weight_dtype=jnp.bfloat16 on v6e/v7x to halve weight DMA bytes.
    """
    in_c, hid_c = params["wih0"].shape
    w0 = jnp.concatenate([params["wih0"], params["whh0"]], axis=0)
    w1 = jnp.concatenate([params["wih1"], params["whh1"]], axis=0)
    b0 = params["bih0"] + params["bhh0"]
    b1 = params["bih1"] + params["bhh1"]
    wc_row = params["wc"].reshape(1, hid_c)
    bc_row = jnp.zeros((1, hid_c), jnp.float32).at[0, 0].set(
        params["bc"].reshape(()).astype(jnp.float32))
    slab = jnp.concatenate(
        [w0.astype(jnp.float32), w1.astype(jnp.float32),
         b0.astype(jnp.float32), b1.astype(jnp.float32),
         wc_row.astype(jnp.float32), bc_row], axis=0)
    rows = slab.shape[0]
    rows_padded = ((rows + 7) // 8) * 8
    slab = jnp.pad(slab, ((0, rows_padded - rows), (0, 0)))
    return dict(wslab=slab.astype(weight_dtype), in_c=int(in_c), hid_c=int(hid_c))


def my_rnn_classifier_seq(packed, xs, hn=None):
    """Run T timesteps of MyRnnClassifier in ONE pallas_call.

    xs : (T, B, in_c)
    hn : (2, B, hid_c) or None
    returns probs (T, B, 1) and final hn (2, B, hid_c), both in xs.dtype.
    """
    T, B, in_c = xs.shape
    hid_c = packed["hid_c"]
    assert in_c == packed["in_c"]
    dtype = xs.dtype
    if hn is None:
        hn = jnp.zeros((2, B, hid_c), dtype=dtype)
    else:
        hn = hn.astype(dtype)
    wslab = packed["wslab"]
    R = wslab.shape[0]

    kernel = functools.partial(_rnn_seq_kernel, in_c=in_c, hid_c=hid_c)

    flops = T * (2 * B * (in_c + hid_c) * hid_c     # fused layer 0
                 + 2 * B * (2 * hid_c) * hid_c      # fused layer 1
                 + 2 * B * hid_c)                   # classifier reduce
    bytes_accessed = int(
        xs.size * xs.dtype.itemsize
        + wslab.size * wslab.dtype.itemsize
        + 2 * hn.size * hn.dtype.itemsize
        + T * B * jnp.dtype(dtype).itemsize)
    cost = pl.CostEstimate(flops=flops,
                           transcendentals=T * (2 * B * hid_c + B),
                           bytes_accessed=bytes_accessed)

    probs, hn_out = pl.pallas_call(
        kernel,
        grid=(T,),
        in_specs=[
            pl.BlockSpec((1, B, in_c), lambda t: (t, 0, 0)),      # x: per step
            pl.BlockSpec((2, B, hid_c), lambda t: (0, 0, 0)),     # hn_in: resident
            pl.BlockSpec((R, hid_c), lambda t: (0, 0)),           # weights: resident
        ],
        out_specs=(
            pl.BlockSpec((T, B, 1), lambda t: (0, 0, 0)),         # probs: resident
            pl.BlockSpec((2, B, hid_c), lambda t: (0, 0, 0)),     # hn_out: resident
        ),
        out_shape=(
            jax.ShapeDtypeStruct((T, B, 1), dtype),
            jax.ShapeDtypeStruct((2, B, hid_c), dtype),
        ),
        scratch_shapes=[pltpu.VMEM((2, B, hid_c), jnp.float32)],  # f32 hn carry
        compiler_params=pltpu.CompilerParams(
            dimension_semantics=("arbitrary",)),                  # recurrence over T
        cost_estimate=cost,
    )(xs, hn, wslab)
    return probs, hn_out


def my_rnn_classifier(packed, x, hn=None):
    """Single-step forward matching MyRnnClassifier.forward.

    x : (B, in_c) or (1, B, in_c);  hn : (2, B, hid_c) or None.
    returns (probs (B, 1), hn (2, B, hid_c)).
    """
    if x.ndim == 3:
        x = jnp.squeeze(x, axis=0)
    probs, hn_out = my_rnn_classifier_seq(packed, x[None, ...], hn)
    return probs[0], hn_out


# ----------------------------- pure-JAX reference ---------------------------

def _reference_step(params, x, hn):
    hn0 = jnp.tanh(x @ params["wih0"] + params["bih0"]
                   + hn[0] @ params["whh0"] + params["bhh0"])
    hn1 = jnp.tanh(hn0 @ params["wih1"] + params["bih1"]
                   + hn[1] @ params["whh1"] + params["bhh1"])
    probs = jax.nn.sigmoid(hn1 @ params["wc"] + params["bc"])
    return probs, jnp.stack([hn0, hn1], axis=0)


def _reference_seq(params, xs, hn=None):
    T, B, _ = xs.shape
    hid_c = params["whh0"].shape[0]
    if hn is None:
        hn = jnp.zeros((2, B, hid_c), dtype=xs.dtype)
    probs_all = []
    for t in range(T):
        p, hn = _reference_step(params, xs[t], hn)
        probs_all.append(p)
    return jnp.stack(probs_all, axis=0), hn


if __name__ == "__main__":
    B, IN_C, HID_C, T = 8, 16, 32, 8
    key = jax.random.PRNGKey(0)
    kp, kx = jax.random.split(key)

    params = init_params(kp, IN_C, HID_C)
    packed = pack_params(params)                       # f32 weights (tight tolerance)
    xs = jax.random.normal(kx, (T, B, IN_C), dtype=jnp.float32)

    # Multi-step path: whole sequence in one kernel launch.
    probs_seq, hn_seq = my_rnn_classifier_seq(packed, xs)
    # Single-step path (module-equivalent API), exercising hn feedback and the
    # (1, B, in_c) input form.
    probs1, hn1 = my_rnn_classifier(packed, xs[0])
    probs2, hn2 = my_rnn_classifier(packed, xs[1][None, ...], hn1)
    (probs_seq, hn_seq, probs1, hn1, probs2, hn2) = jax.block_until_ready(
        (probs_seq, hn_seq, probs1, hn1, probs2, hn2))

    probs_seq_ref, hn_seq_ref = _reference_seq(params, xs)
    probs1_ref, hn1_ref = _reference_step(
        params, xs[0], jnp.zeros((2, B, HID_C), jnp.float32))
    probs2_ref, hn2_ref = _reference_step(params, xs[1], hn1_ref)

    assert probs_seq.shape == (T, B, 1) and hn_seq.shape == (2, B, HID_C)
    assert probs1.shape == (B, 1) and hn1.shape == (2, B, HID_C)
    assert probs_seq.dtype == xs.dtype and hn_seq.dtype == xs.dtype
    assert jnp.allclose(probs_seq, probs_seq_ref, atol=1e-5, rtol=1e-5)
    assert jnp.allclose(hn_seq, hn_seq_ref, atol=1e-5, rtol=1e-5)
    assert jnp.allclose(probs1, probs1_ref, atol=1e-5, rtol=1e-5)
    assert jnp.allclose(hn1, hn1_ref, atol=1e-5, rtol=1e-5)
    assert jnp.allclose(probs2, probs2_ref, atol=1e-5, rtol=1e-5)
    assert jnp.allclose(hn2, hn2_ref, atol=1e-5, rtol=1e-5)
    # Consistency between the fused-sequence path and repeated single steps.
    assert jnp.allclose(probs_seq[0], probs1, atol=1e-5, rtol=1e-5)
    assert jnp.allclose(probs_seq[1], probs2, atol=1e-5, rtol=1e-5)

    print("KERNEL_OK")
</pallas_src>

<mosaic_0001>
module attributes {stable_mosaic.version = 11 : i64} {
  func.func @_rnn_seq_kernel(%arg0: i32, %arg1: memref<1x8x16xf32, #tpu.memory_space<vmem>>, %arg2: memref<2x8x32xf32, #tpu.memory_space<vmem>>, %arg3: memref<120x32xf32, #tpu.memory_space<vmem>>, %arg4: memref<8x8x1xf32, #tpu.memory_space<vmem>>, %arg5: memref<2x8x32xf32, #tpu.memory_space<vmem>>, %arg6: memref<2x8x32xf32, #tpu.memory_space<vmem>>) attributes {dimension_semantics = [#tpu.dimension_semantics<arbitrary>], iteration_bounds = array<i64: 8>, scalar_prefetch = 0 : i64, scratch_operands = 1 : i64, tpu.core_type = #tpu.core_type<tc>, window_params = [{transform_indices = @transform_0, window_bounds = array<i64: 1, 8, 16>}, {pipeline_mode = #tpu.pipeline_mode<synchronous>, transform_indices = @transform_1, window_bounds = array<i64: 2, 8, 32>}, {pipeline_mode = #tpu.pipeline_mode<synchronous>, transform_indices = @transform_2, window_bounds = array<i64: 120, 32>}, {pipeline_mode = #tpu.pipeline_mode<synchronous>, transform_indices = @transform_3, window_bounds = array<i64: 8, 8, 1>}, {pipeline_mode = #tpu.pipeline_mode<synchronous>, transform_indices = @transform_4, window_bounds = array<i64: 2, 8, 32>}]} {
    %c0_i32 = arith.constant 0 : i32
    %0 = arith.cmpi eq, %arg0, %c0_i32 : i32
    %1 = arith.extui %0 : i1 to i32
    %c0_i32_0 = arith.constant 0 : i32
    %2 = arith.cmpi ne, %1, %c0_i32_0 : i32
    scf.if %2 {
      %c0_24 = arith.constant 0 : index
      %c0_25 = arith.constant 0 : index
      %c0_26 = arith.constant 0 : index
      %50 = vector.load %arg2[%c0_24, %c0_25, %c0_26] : memref<2x8x32xf32, #tpu.memory_space<vmem>>, vector<2x8x32xf32>
      %c0_27 = arith.constant 0 : index
      %c0_28 = arith.constant 0 : index
      %c0_29 = arith.constant 0 : index
      %51 = vector.load %arg6[%c0_27, %c0_28, %c0_29] : memref<2x8x32xf32, #tpu.memory_space<vmem>>, vector<2x8x32xf32>
      tpu.vector_store %arg6[%c0_27, %c0_28, %c0_29], %50 {strides = array<i32>} : memref<2x8x32xf32, #tpu.memory_space<vmem>>, vector<2x8x32xf32>,
    } else {
    }
    %c0 = arith.constant 0 : index
    %c0_1 = arith.constant 0 : index
    %c0_2 = arith.constant 0 : index
    %3 = vector.load %arg1[%c0, %c0_1, %c0_2] : memref<1x8x16xf32, #tpu.memory_space<vmem>>, vector<1x8x16xf32>
    %4 = vector.shape_cast %3 : vector<1x8x16xf32> to vector<8x16xf32>
    %c0_3 = arith.constant 0 : index
    %c0_4 = arith.constant 0 : index
    %c0_5 = arith.constant 0 : index
    %5 = vector.load %arg6[%c0_3, %c0_4, %c0_5] : memref<2x8x32xf32, #tpu.memory_space<vmem>>, vector<1x8x32xf32>
    %6 = vector.shape_cast %5 : vector<1x8x32xf32> to vector<8x32xf32>
    %c1 = arith.constant 1 : index
    %c0_6 = arith.constant 0 : index
    %c0_7 = arith.constant 0 : index
    %7 = vector.load %arg6[%c1, %c0_6, %c0_7] : memref<2x8x32xf32, #tpu.memory_space<vmem>>, vector<1x8x32xf32>
    %8 = vector.shape_cast %7 : vector<1x8x32xf32> to vector<8x32xf32>
    %c0_8 = arith.constant 0 : index
    %c0_9 = arith.constant 0 : index
    %9 = vector.load %arg3[%c0_8, %c0_9] : memref<120x32xf32, #tpu.memory_space<vmem>>, vector<48x32xf32>
    %c48 = arith.constant 48 : index
    %c0_10 = arith.constant 0 : index
    %10 = vector.load %arg3[%c48, %c0_10] : memref<120x32xf32, #tpu.memory_space<vmem>>, vector<64x32xf32>
    %c112 = arith.constant 112 : index
    %c0_11 = arith.constant 0 : index
    %11 = vector.load %arg3[%c112, %c0_11] : memref<120x32xf32, #tpu.memory_space<vmem>>, vector<4x32xf32>
    %12 = vector.extract_strided_slice %11 {offsets = [0, 0], sizes = [1, 32], strides = [1, 1]} : vector<4x32xf32> to vector<1x32xf32>
    %13 = vector.extract_strided_slice %11 {offsets = [1, 0], sizes = [1, 32], strides = [1, 1]} : vector<4x32xf32> to vector<1x32xf32>
    %14 = vector.extract_strided_slice %11 {offsets = [2, 0], sizes = [1, 32], strides = [1, 1]} : vector<4x32xf32> to vector<1x32xf32>
    %15 = vector.extract_strided_slice %11 {offsets = [3, 0], sizes = [1, 1], strides = [1, 1]} : vector<4x32xf32> to vector<1x1xf32>
    %16 = tpu.concatenate %4, %6 in 1 : vector<8x16xf32>, vector<8x32xf32> -> vector<8x48xf32>
    %cst = arith.constant dense<0.000000e+00> : vector<8x32xf32>
    %17 = tpu.matmul %16, %9, %cst {dimension_numbers = #tpu.dot_dimension_numbers<[1], [0], [0], [1], [0, 0, 1, 1], [], []>} : vector<8x48xf32>, vector<48x32xf32>, vector<8x32xf32> -> vector<8x32xf32>
    %18 = vector.broadcast %12 : vector<1x32xf32> to vector<8x32xf32>
    %19 = arith.addf %17, %18 : vector<8x32xf32>
    %20 = math.tanh %19 : vector<8x32xf32>
    %21 = tpu.concatenate %20, %8 in 1 : vector<8x32xf32>, vector<8x32xf32> -> vector<8x64xf32>
    %cst_12 = arith.constant dense<0.000000e+00> : vector<8x32xf32>
    %22 = tpu.matmul %21, %10, %cst_12 {dimension_numbers = #tpu.dot_dimension_numbers<[1], [0], [0], [1], [0, 0, 1, 1], [], []>} : vector<8x64xf32>, vector<64x32xf32>, vector<8x32xf32> -> vector<8x32xf32>
    %23 = vector.broadcast %13 : vector<1x32xf32> to vector<8x32xf32>
    %24 = arith.addf %22, %23 : vector<8x32xf32>
    %25 = math.tanh %24 : vector<8x32xf32>
    %26 = vector.broadcast %14 : vector<1x32xf32> to vector<8x32xf32>
    %27 = arith.mulf %25, %26 : vector<8x32xf32>
    %cst_13 = arith.constant dense<0.000000e+00> : vector<8xf32>
    %28 = vector.multi_reduction <add>, %27, %cst_13 [1] : vector<8x32xf32> to vector<8xf32>
    %29 = vector.shape_cast %28 : vector<8xf32> to vector<8x1xf32>
    %30 = vector.broadcast %15 : vector<1x1xf32> to vector<8x1xf32>
    %31 = arith.addf %29, %30 : vector<8x1xf32>
    %32 = arith.negf %31 : vector<8x1xf32>
    %33 = math.exp %32 : vector<8x1xf32>
    %cst_14 = arith.constant 1.000000e+00 : f32
    %34 = vector.broadcast %cst_14 : f32 to vector<8x1xf32>
    %35 = arith.addf %34, %33 : vector<8x1xf32>
    %36 = arith.divf %34, %35 : vector<8x1xf32>
    %37 = arith.index_cast %arg0 : i32 to index
    %c0_15 = arith.constant 0 : index
    %c0_16 = arith.constant 0 : index
    %38 = vector.load %arg4[%37, %c0_15, %c0_16] : memref<8x8x1xf32, #tpu.memory_space<vmem>>, vector<1x8x1xf32>
    %39 = vector.shape_cast %38 : vector<1x8x1xf32> to vector<8x1xf32>
    %40 = vector.shape_cast %36 : vector<8x1xf32> to vector<1x8x1xf32>
    tpu.vector_store %arg4[%37, %c0_15, %c0_16], %40 {strides = array<i32>} : memref<8x8x1xf32, #tpu.memory_space<vmem>>, vector<1x8x1xf32>,
    %c0_17 = arith.constant 0 : index
    %c0_18 = arith.constant 0 : index
    %c0_19 = arith.constant 0 : index
    %41 = vector.load %arg6[%c0_17, %c0_18, %c0_19] : memref<2x8x32xf32, #tpu.memory_space<vmem>>, vector<1x8x32xf32>
    %42 = vector.shape_cast %41 : vector<1x8x32xf32> to vector<8x32xf32>
    %43 = vector.shape_cast %20 : vector<8x32xf32> to vector<1x8x32xf32>
    tpu.vector_store %arg6[%c0_17, %c0_18, %c0_19], %43 {strides = array<i32>} : memref<2x8x32xf32, #tpu.memory_space<vmem>>, vector<1x8x32xf32>,
    %c1_20 = arith.constant 1 : index
    %c0_21 = arith.constant 0 : index
    %c0_22 = arith.constant 0 : index
    %44 = vector.load %arg6[%c1_20, %c0_21, %c0_22] : memref<2x8x32xf32, #tpu.memory_space<vmem>>, vector<1x8x32xf32>
    %45 = vector.shape_cast %44 : vector<1x8x32xf32> to vector<8x32xf32>
    %46 = vector.shape_cast %25 : vector<8x32xf32> to vector<1x8x32xf32>
    tpu.vector_store %arg6[%c1_20, %c0_21, %c0_22], %46 {strides = array<i32>} : memref<2x8x32xf32, #tpu.memory_space<vmem>>, vector<1x8x32xf32>,
    %c7_i32 = arith.constant 7 : i32
    %47 = arith.cmpi eq, %arg0, %c7_i32 : i32
    %48 = arith.extui %47 : i1 to i32
    %c0_i32_23 = arith.constant 0 : i32
    %49 = arith.cmpi ne, %48, %c0_i32_23 : i32
    scf.if %49 {
      %c0_24 = arith.constant 0 : index
      %c0_25 = arith.constant 0 : index
      %c0_26 = arith.constant 0 : index
      %50 = vector.load %arg6[%c0_24, %c0_25, %c0_26] : memref<2x8x32xf32, #tpu.memory_space<vmem>>, vector<2x8x32xf32>
      %c0_27 = arith.constant 0 : index
      %c0_28 = arith.constant 0 : index
      %c0_29 = arith.constant 0 : index
      %51 = vector.load %arg5[%c0_27, %c0_28, %c0_29] : memref<2x8x32xf32, #tpu.memory_space<vmem>>, vector<2x8x32xf32>
      tpu.vector_store %arg5[%c0_27, %c0_28, %c0_29], %50 {strides = array<i32>} : memref<2x8x32xf32, #tpu.memory_space<vmem>>, vector<2x8x32xf32>,
    } else {
    }
    return
  }
  func.func @transform_0(%arg0: i32) -> (i32, i32, i32) {
    %c0_i32 = arith.constant 0 : i32
    %c0_i32_0 = arith.constant 0 : i32
    %c0_i32_1 = arith.constant 0 : i32
    return %arg0, %c0_i32, %c0_i32_0 : i32, i32, i32
  }
  func.func @transform_1(%arg0: i32) -> (i32, i32, i32) {
    %c0_i32 = arith.constant 0 : i32
    %c0_i32_0 = arith.constant 0 : i32
    %c0_i32_1 = arith.constant 0 : i32
    %c0_i32_2 = arith.constant 0 : i32
    return %c0_i32, %c0_i32_0, %c0_i32_1 : i32, i32, i32
  }
  func.func @transform_2(%arg0: i32) -> (i32, i32) {
    %c0_i32 = arith.constant 0 : i32
    %c0_i32_0 = arith.constant 0 : i32
    %c0_i32_1 = arith.constant 0 : i32
    return %c0_i32, %c0_i32_0 : i32, i32
  }
  func.func @transform_3(%arg0: i32) -> (i32, i32, i32) {
    %c0_i32 = arith.constant 0 : i32
    %c0_i32_0 = arith.constant 0 : i32
    %c0_i32_1 = arith.constant 0 : i32
    %c0_i32_2 = arith.constant 0 : i32
    return %c0_i32, %c0_i32_0, %c0_i32_1 : i32, i32, i32
  }
  func.func @transform_4(%arg0: i32) -> (i32, i32, i32) {
    %c0_i32 = arith.constant 0 : i32
    %c0_i32_0 = arith.constant 0 : i32
    %c0_i32_1 = arith.constant 0 : i32
    %c0_i32_2 = arith.constant 0 : i32
    return %c0_i32, %c0_i32_0, %c0_i32_1 : i32, i32, i32
  }
}

</mosaic_0001>

<llo_original>
// kernel: tpu_custom_call.1
$region0: #{tpu_custom_call.1}
  #allocation0 [shape = 'u32[]', space=smem, size = 0x4, offset = 0x4, fixed_abs, tag = 'smem constant byte address 0x4 - core index']
  #allocation1 [shape = 'u32[144,128]{1,0:T(1,128)}', space=vmem, size = 0x12000, scoped, tag = 'internal scratch']
  #allocation2 [shape = 'f32[2,8,32]{2,1,0:T(8,128)}', space=vmem, size = 0x2000, scoped, tag = 'scratch operand']
  %s0 = inlined_call_operand.vmem [shape: f32[8,8,16], index: 0, kind: input, shape index: {}]
  %s1 = inlined_call_operand.vmem [shape: f32[2,8,32], index: 1, kind: input, shape index: {}]
  %s2 = inlined_call_operand.vmem [shape: f32[120,32], index: 2, kind: input, shape index: {}]
  %s3 = inlined_call_operand.vmem [shape: f32[8,8,1], index: 3, kind: output, shape index: {0}]
  %s4 = inlined_call_operand.hbm [shape: f32[2,8,32], index: 4, kind: output, shape index: {1}]
  %5 = xla_tuple %s3, %s4
  %s6 = sld [smem:[#allocation0]]
  $region61: #{tpu_custom_call.1} parent=0
    _
  %s8 = ssub.s32 1, %s6
  %s9 = scalar_select 0, %s8, %s6
  $region1: #{tpu_custom_call.1} parent=0
    #allocation3 [shape = 'u8[8192]{0}', space=vmem, size = 0x2000, scoped, tag = 'output window, operand 1, single buffered']
    #allocation4 [shape = 's32[2]{0}', space=sflag, size = 0x8, scoped, tag = 'scoped memory for tpu_custom_call.1']
    %10 = vsyncpa [#allocation4], 0
    loop: start=0, step=1, limit=10
    $region2: #{tpu_custom_call.1} parent=1 // loop_pre_header
      _
    $region3: #{tpu_custom_call.1} parent=1 // loop_header
      %s12 = sphi 0, %s16
      %p13 = scmp.ge.s32.totalorder %s12, 10
      %s22 = sphi 0, %s24
      %s25 = sphi 0, %s22
      %s26 = sphi 0, %s25
      %s42 = sphi 0, %s26
      %s46 = sphi 0, %s46
      %s48 = sphi 0, %s46
      %s49 = sphi 0, %s48
      %s63 = sphi 0, %s49
      %s67 = sphi 0, %s67
      %s69 = sphi 0, %s67
      %s70 = sphi 0, %s69
      %s84 = sphi 0, %s70
      %s88 = sphi 0, %s88
      %s90 = sphi 0, %s88
      %s91 = sphi 0, %s90
      %s105 = sphi 0, %s91
      %s109 = sphi 0, %s109
      %s111 = sphi 0, %s109
      %s112 = sphi 0, %s111
      %s126 = sphi 0, %s112
    $region4: #{tpu_custom_call.1} parent=1 // loop_header_branch
      %15 = sbr.rel (%p13) target = $region8
    $region5: #{tpu_custom_call.1} parent=1 // loop_body
      %s17 = ssub.s32 %s12, 1
      %s18 = ssub.s32 %s12, 2
      %s19 = sadd.s32 %s12, 1
      %s20 = ssub.s32 %s12, %s19
      %p21 = scmp.eq.s32.totalorder %s20, 0
      %s23 = sadd.s32 %s22, 1
      %s24 = scalar_select %p21, %s22, %s23
      %p27 = pneg %p21
      %p28 = scmp.eq.s32.totalorder %s12, 7
      %p29 = por %p27, %p28
      %p30 = scmp.ne.s32.totalorder %s22, %s25
      %p31 = scmp.eq.s32.totalorder %s12, 0
      %p32 = por %p30, %p31
      %p33 = scmp.ne.s32.totalorder %s22, %s25
      %p34 = scmp.eq.s32.totalorder %s17, 7
      %p35 = por %p33, %p34
      %p36 = scmp.ne.s32.totalorder %s25, %s26
      %p37 = scmp.eq.s32.totalorder %s17, 0
      %p38 = por %p36, %p37
      %p39 = scmp.ne.s32.totalorder %s25, %s26
      %p40 = scmp.eq.s32.totalorder %s18, 7
      %p41 = por %p39, %p40
      %p43 = scmp.ne.s32.totalorder %s26, %s42
      %p44 = scmp.eq.s32.totalorder %s18, 0
      %p45 = por %p43, %p44
      %s47 = sadd.s32 %s46, 1
      %p50 = scmp.eq.s32.totalorder %s12, 7
      %p51 = scmp.ne.s32.totalorder %s46, %s48
      %p52 = scmp.eq.s32.totalorder %s12, 0
      %p53 = por %p51, %p52
      %p54 = scmp.ne.s32.totalorder %s46, %s48
      %p55 = scmp.eq.s32.totalorder %s17, 7
      %p56 = por %p54, %p55
      %p57 = scmp.ne.s32.totalorder %s48, %s49
      %p58 = scmp.eq.s32.totalorder %s17, 0
      %p59 = por %p57, %p58
      %p60 = scmp.ne.s32.totalorder %s48, %s49
      %p61 = scmp.eq.s32.totalorder %s18, 7
      %p62 = por %p60, %p61
      %p64 = scmp.ne.s32.totalorder %s49, %s63
      %p65 = scmp.eq.s32.totalorder %s18, 0
      %p66 = por %p64, %p65
      %s68 = sadd.s32 %s67, 1
      %p71 = scmp.eq.s32.totalorder %s12, 7
      %p72 = scmp.ne.s32.totalorder %s67, %s69
      %p73 = scmp.eq.s32.totalorder %s12, 0
      %p74 = por %p72, %p73
      %p75 = scmp.ne.s32.totalorder %s67, %s69
      %p76 = scmp.eq.s32.totalorder %s17, 7
      %p77 = por %p75, %p76
      %p78 = scmp.ne.s32.totalorder %s69, %s70
      %p79 = scmp.eq.s32.totalorder %s17, 0
      %p80 = por %p78, %p79
      %p81 = scmp.ne.s32.totalorder %s69, %s70
      %p82 = scmp.eq.s32.totalorder %s18, 7
      %p83 = por %p81, %p82
      %p85 = scmp.ne.s32.totalorder %s70, %s84
      %p86 = scmp.eq.s32.totalorder %s18, 0
      %p87 = por %p85, %p86
      %s89 = sadd.s32 %s88, 1
      %p92 = scmp.eq.s32.totalorder %s12, 7
      %p93 = scmp.ne.s32.totalorder %s88, %s90
      %p94 = scmp.eq.s32.totalorder %s12, 0
      %p95 = por %p93, %p94
      %p96 = scmp.ne.s32.totalorder %s88, %s90
      %p97 = scmp.eq.s32.totalorder %s17, 7
      %p98 = por %p96, %p97
      %p99 = scmp.ne.s32.totalorder %s90, %s91
      %p100 = scmp.eq.s32.totalorder %s17, 0
      %p101 = por %p99, %p100
      %p102 = scmp.ne.s32.totalorder %s90, %s91
      %p103 = scmp.eq.s32.totalorder %s18, 7
      %p104 = por %p102, %p103
      %p106 = scmp.ne.s32.totalorder %s91, %s105
      %p107 = scmp.eq.s32.totalorder %s18, 0
      %p108 = por %p106, %p107
      %s110 = sadd.s32 %s109, 1
      %p113 = scmp.eq.s32.totalorder %s12, 7
      %p114 = scmp.ne.s32.totalorder %s109, %s111
      %p115 = scmp.eq.s32.totalorder %s12, 0
      %p116 = por %p114, %p115
      %p117 = scmp.ne.s32.totalorder %s109, %s111
      %p118 = scmp.eq.s32.totalorder %s17, 7
      %p119 = por %p117, %p118
      %p120 = scmp.ne.s32.totalorder %s111, %s112
      %p121 = scmp.eq.s32.totalorder %s17, 0
      %p122 = por %p120, %p121
      %p123 = scmp.ne.s32.totalorder %s111, %s112
      %p124 = scmp.eq.s32.totalorder %s18, 7
      %p125 = por %p123, %p124
      %p127 = scmp.ne.s32.totalorder %s112, %s126
      %p128 = scmp.eq.s32.totalorder %s18, 0
      %p129 = por %p127, %p128
      %p130 = scmp.le.s32.totalorder 1, %s12
      %p131 = scmp.lt.s32.totalorder %s12, 9
      %p132 = pnand %p130, %p131
      %p133 = pneg %p132
      // Predicated region
      $region9: #{tpu_custom_call.1} parent=5 // pred_check
        _
      $region10: #{tpu_custom_call.1} parent=5 // pred_check_branch
        %135 = sbr.rel (%p132) target = $region12
      $region11: #{tpu_custom_call.1} parent=5 // pred_region
        %s136 = ssub.s32 %s12, 1
        // Predicated region
        $region13: #{tpu_custom_call.1} parent=11 // pred_check
          %p137 = pneg %p59
        $region14: #{tpu_custom_call.1} parent=11 // pred_check_branch
          %139 = sbr.rel (%p137) target = $region16
        $region15: #{tpu_custom_call.1} parent=11 // pred_region
          _
        $region16: #{tpu_custom_call.1} parent=11 // pred_fallthru
          _
        // Predicated region
        $region17: #{tpu_custom_call.1} parent=11 // pred_check
          %p140 = pneg %p80
        $region18: #{tpu_custom_call.1} parent=11 // pred_check_branch
          %142 = sbr.rel (%p140) target = $region20
        $region19: #{tpu_custom_call.1} parent=11 // pred_region
          _
        $region20: #{tpu_custom_call.1} parent=11 // pred_fallthru
          _
      $region12: #{tpu_custom_call.1} parent=5 // pred_fallthru
        _
      %p143 = scmp.lt.s32.totalorder %s12, 8
      // Predicated region
      $region21: #{tpu_custom_call.1} parent=5 // pred_check
        %p144 = pneg %p143
      $region22: #{tpu_custom_call.1} parent=5 // pred_check_branch
        %146 = sbr.rel (%p144) target = $region24
      $region23: #{tpu_custom_call.1} parent=5 // pred_region
        // Predicated region
        $region25: #{tpu_custom_call.1} parent=23 // pred_check
          %p147 = pneg %p32
        $region26: #{tpu_custom_call.1} parent=23 // pred_check_branch
          %149 = sbr.rel (%p147) target = $region28
        $region27: #{tpu_custom_call.1} parent=23 // pred_region
          %p150 = scmp.lt.s32.totalorder %s12, 7
          %s151 = scalar_select %p150, %s12, 7
          %s152 = smul.addr %s151, 8
          %s153 = scalar_lea.vmem %s0, %s152
        $region28: #{tpu_custom_call.1} parent=23 // pred_fallthru
          _
      $region24: #{tpu_custom_call.1} parent=5 // pred_fallthru
        _
      %p154 = scmp.le.s32.totalorder 1, %s12
      %p155 = scmp.lt.s32.totalorder %s12, 9
      %p156 = pnand %p154, %p155
      %p157 = pneg %p156
      // Predicated region
      $region29: #{tpu_custom_call.1} parent=5 // pred_check
        _
      $region30: #{tpu_custom_call.1} parent=5 // pred_check_branch
        %159 = sbr.rel (%p156) target = $region32
      $region31: #{tpu_custom_call.1} parent=5 // pred_region
        %s160 = ssub.s32 %s12, 1
        %p161 = scmp.lt.s32.totalorder %s17, 7
        %s162 = scalar_select %p161, %s17, 7
        %s163 = smul.addr %s162, 8
        %s164 = scalar_lea.vmem %s0, %s163
        %p165 = pneg %p38
        %p166 = pneg %p35
        %p167 = pneg %p59
        %p168 = pneg %p56
        %p169 = pneg %p80
        %p170 = pneg %p77
        %p171 = pneg %p101
        %p172 = pneg %p98
        %p173 = pneg %p122
        %p174 = pneg %p119
        %p175 = scmp.lt.s32.totalorder %s17, 7
        %s176 = scalar_select %p175, %s17, 7
        %s177 = smul.addr %s176, 8
        %s178 = scalar_lea.vmem %s0, %s177
        %p179 = scmp.eq.s32.totalorder %s17, 0
        // Predicated region
        $region33: #{tpu_custom_call.1} parent=31 // pred_check
          %p180 = pneg %p179
        $region34: #{tpu_custom_call.1} parent=31 // pred_check_branch
          %182 = sbr.rel (%p180) target = $region36
        $region35: #{tpu_custom_call.1} parent=31 // pred_region
          %v183 = vld [vmem:[%s1] sm:$0xff]
          %v184 = vld [vmem:[%s1 + $0x8] sm:$0xff]
          %vm185 = vcmask 261120
          %186 = vst.msk [vmem:[#allocation2] sm:$0xff] %vm185, %v183
          %187 = vst.msk [vmem:[#allocation2 + $0x8] sm:$0xff] %vm185, %v184
        $region36: #{tpu_custom_call.1} parent=31 // pred_fallthru
          _
        %v188 = vld [vmem:[%s178] sm:$0xff]
        %v189 = vld [vmem:[#allocation2] sm:$0xff]
        %s190 = scalar_lea.vmem [#allocation2], 8
        %v191 = vld [vmem:[%s190] sm:$0xff]
        %v192 = vld [vmem:[%s2] sm:$0xff]
        %v193 = vld [vmem:[%s2 + $0x8] sm:$0xff]
        %v194 = vld [vmem:[%s2 + $0x10] sm:$0xff]
        %v195 = vld [vmem:[%s2 + $0x18] sm:$0xff]
        %v196 = vld [vmem:[%s2 + $0x20] sm:$0xff]
        %v197 = vld [vmem:[%s2 + $0x28] sm:$0xff]
        %v198 = vld [vmem:[%s2 + $0x30] sm:$0xff]
        %v199 = vld [vmem:[%s2 + $0x38] sm:$0xff]
        %v200 = vld [vmem:[%s2 + $0x40] sm:$0xff]
        %v201 = vld [vmem:[%s2 + $0x48] sm:$0xff]
        %v202 = vld [vmem:[%s2 + $0x50] sm:$0xff]
        %v203 = vld [vmem:[%s2 + $0x58] sm:$0xff]
        %v204 = vld [vmem:[%s2 + $0x60] sm:$0xff]
        %v205 = vld [vmem:[%s2 + $0x68] sm:$0xff]
        %v206 = vld [vmem:[%s2 + $0x70] sm:$0xf]
        %208 = vrot.lane.b32.xlu0 %v189, 16
        %v209 = vpop.permute.xlu0 %208
        %vm211 = vcmask 130048
        %v212 = vsel %vm211, %v188, %v209
        %v213 = vlaneseq
        %v214 = vshrl.u32 %v213, 7
        %v215 = vsub.s32 0, %v214
        %v216 = vrot.slane %v206, %v215
        %vm217 = vcmask 392192
        %v219 = vsel %vm217, %v212, 0
        %221 = vmatprep.subr.mxu0 0.0
        %222 = vmatpush1.msra.mxu0 %v192
        %223 = vmatprep.subr.mxu0 0.0
        %224 = vmatpush1.msra.mxu0 %v193
        %225 = vmatprep.subr.mxu0 0.0
        %226 = vmatpush1.msra.mxu0 %v194
        %227 = vmatprep.subr.mxu0 0.0
        %228 = vmatpush1.msra.mxu0 %v195
        %229 = vmatprep.subr.mxu0 0.0
        %230 = vmatpush1.msra.mxu0 %v196
        %231 = vmatprep.subr.mxu0 0.0
        %232 = vmatpush1.msra.mxu0 %v197
        %233 = vmatprep.subr.mxu0 0.0
        %234 = vmatpush1.msra.mxu0 0.0
        %235 = vmatprep.subr.mxu0 0.0
        %236 = vmatpush1.msra.mxu0 0.0
        %237 = vmatprep.subr.mxu0 0.0
        %238 = vmatpush1.msra.mxu0 0.0
        %239 = vmatprep.subr.mxu0 0.0
        %240 = vmatpush1.msra.mxu0 0.0
        %241 = vmatprep.subr.mxu0 0.0
        %242 = vmatpush1.msra.mxu0 0.0
        %243 = vmatprep.subr.mxu0 0.0
        %244 = vmatpush1.msra.mxu0 0.0
        %245 = vmatprep.subr.mxu0 0.0
        %246 = vmatpush1.msra.mxu0 0.0
        %247 = vmatprep.subr.mxu0 0.0
        %248 = vmatpush1.msra.mxu0 0.0
        %249 = vmatprep.subr.mxu0 0.0
        %250 = vmatpush1.msra.mxu0 0.0
        %251 = vmatprep.subr.mxu0 0.0
        %252 = vmatpush1.msra.mxu0 0.0
        %253 = vmatprep.subr.mxu0 0.0
        %254 = vmatpush1.msra.mxu0 0.0
        %255 = vmatprep.subr.mxu0 0.0
        %256 = vmatpush1.msra.mxu0 0.0
        %257 = vmatprep.subr.mxu0 0.0
        %258 = vmatpush1.msra.mxu0 0.0
        %259 = vmatprep.subr.mxu0 0.0
        %260 = vmatpush1.msra.mxu0 0.0
        %261 = vmatprep.subr.mxu0 0.0
        %262 = vmatpush1.msra.mxu0 0.0
        %263 = vmatprep.subr.mxu0 0.0
        %264 = vmatpush1.msra.mxu0 0.0
        %265 = vmatprep.subr.mxu0 0.0
        %266 = vmatpush1.msra.mxu0 0.0
        %267 = vmatprep.subr.mxu0 0.0
        %268 = vmatpush1.msra.mxu0 0.0
        %269 = vmatprep.subr.mxu0 0.0
        %270 = vmatpush1.msra.mxu0 0.0
        %271 = vmatprep.subr.mxu0 0.0
        %272 = vmatpush1.msra.mxu0 0.0
        %273 = vmatprep.subr.mxu0 0.0
        %274 = vmatpush1.msra.mxu0 0.0
        %275 = vmatprep.subr.mxu0 0.0
        %276 = vmatpush1.msra.mxu0 0.0
        %277 = vmatprep.subr.mxu0 0.0
        %278 = vmatpush1.msra.mxu0 0.0
        %279 = vmatprep.subr.mxu0 0.0
        %280 = vmatpush1.msra.mxu0 0.0
        %281 = vmatprep.subr.mxu0 0.0
        %282 = vmatpush1.msra.mxu0 0.0
        %283 = vmatprep.subr.mxu0 0.0
        %284 = vmatpush1.msra.mxu0 0.0
        %285 = vmatprep.mubr.f32.mxu0 0.0
        %286 = vmatmul.mubr.f32.gmra.mrb[0].mxu0 %v219
        %v287 = vpop.f32.mrb[0].mxu0
        %v288 = vadd.f32 %v216, %v287
        %v289 = vpop.f32.mrb[0].mxu0
        %290 = vdwg.mxu0
        %v291 = vtanh.pop %v288
        %293 = vrot.lane.b32.xlu0 %v191, 32
        %v294 = vpop.permute.xlu0 %293
        %vm296 = vcmask 261120
        %v297 = vsel %vm296, %v291, %v294
        %v298 = vlaneseq
        %v299 = vshrl.u32 %v298, 7
        %v300 = vsub.s32 1, %v299
        %v301 = vrot.slane %v206, %v300
        %vm302 = vcmask 523264
        %v304 = vsel %vm302, %v297, 0
        %306 = vmatprep.subr.mxu0 0.0
        %307 = vmatpush1.msra.mxu0 %v198
        %308 = vmatprep.subr.mxu0 0.0
        %309 = vmatpush1.msra.mxu0 %v199
        %310 = vmatprep.subr.mxu0 0.0
        %311 = vmatpush1.msra.mxu0 %v200
        %312 = vmatprep.subr.mxu0 0.0
        %313 = vmatpush1.msra.mxu0 %v201
        %314 = vmatprep.subr.mxu0 0.0
        %315 = vmatpush1.msra.mxu0 %v202
        %316 = vmatprep.subr.mxu0 0.0
        %317 = vmatpush1.msra.mxu0 %v203
        %318 = vmatprep.subr.mxu0 0.0
        %319 = vmatpush1.msra.mxu0 %v204
        %320 = vmatprep.subr.mxu0 0.0
        %321 = vmatpush1.msra.mxu0 %v205
        %322 = vmatprep.subr.mxu0 0.0
        %323 = vmatpush1.msra.mxu0 0.0
        %324 = vmatprep.subr.mxu0 0.0
        %325 = vmatpush1.msra.mxu0 0.0
        %326 = vmatprep.subr.mxu0 0.0
        %327 = vmatpush1.msra.mxu0 0.0
        %328 = vmatprep.subr.mxu0 0.0
        %329 = vmatpush1.msra.mxu0 0.0
        %330 = vmatprep.subr.mxu0 0.0
        %331 = vmatpush1.msra.mxu0 0.0
        %332 = vmatprep.subr.mxu0 0.0
        %333 = vmatpush1.msra.mxu0 0.0
        %334 = vmatprep.subr.mxu0 0.0
        %335 = vmatpush1.msra.mxu0 0.0
        %336 = vmatprep.subr.mxu0 0.0
        %337 = vmatpush1.msra.mxu0 0.0
        %338 = vmatprep.subr.mxu0 0.0
        %339 = vmatpush1.msra.mxu0 0.0
        %340 = vmatprep.subr.mxu0 0.0
        %341 = vmatpush1.msra.mxu0 0.0
        %342 = vmatprep.subr.mxu0 0.0
        %343 = vmatpush1.msra.mxu0 0.0
        %344 = vmatprep.subr.mxu0 0.0
        %345 = vmatpush1.msra.mxu0 0.0
        %346 = vmatprep.subr.mxu0 0.0
        %347 = vmatpush1.msra.mxu0 0.0
        %348 = vmatprep.subr.mxu0 0.0
        %349 = vmatpush1.msra.mxu0 0.0
        %350 = vmatprep.subr.mxu0 0.0
        %351 = vmatpush1.msra.mxu0 0.0
        %352 = vmatprep.subr.mxu0 0.0
        %353 = vmatpush1.msra.mxu0 0.0
        %354 = vmatprep.subr.mxu0 0.0
        %355 = vmatpush1.msra.mxu0 0.0
        %356 = vmatprep.subr.mxu0 0.0
        %357 = vmatpush1.msra.mxu0 0.0
        %358 = vmatprep.subr.mxu0 0.0
        %359 = vmatpush1.msra.mxu0 0.0
        %360 = vmatprep.subr.mxu0 0.0
        %361 = vmatpush1.msra.mxu0 0.0
        %362 = vmatprep.subr.mxu0 0.0
        %363 = vmatpush1.msra.mxu0 0.0
        %364 = vmatprep.subr.mxu0 0.0
        %365 = vmatpush1.msra.mxu0 0.0
        %366 = vmatprep.subr.mxu0 0.0
        %367 = vmatpush1.msra.mxu0 0.0
        %368 = vmatprep.subr.mxu0 0.0
        %369 = vmatpush1.msra.mxu0 0.0
        %370 = vmatprep.mubr.f32.mxu0 0.0
        %371 = vmatmul.mubr.f32.gmra.mrb[0].mxu0 %v304
        %v372 = vpop.f32.mrb[0].mxu0
        %v373 = vadd.f32 %v301, %v372
        %v374 = vpop.f32.mrb[0].mxu0
        %375 = vdwg.mxu0
        %v376 = vtanh.pop %v373
        %v377 = vlaneseq
        %v378 = vshrl.u32 %v377, 7
        %v379 = vsub.s32 2, %v378
        %v380 = vrot.slane %v206, %v379
        %v381 = vmul.f32 %v376, %v380
        %v382 = vsel %vm296, %v381, 0.0
        %383 = vadd.xlane.f32.xlu0 %v382
        %v384 = vpop.xlane.xlu0 %383
        %v385 = vlaneseq
        %v386 = vshrl.u32 %v385, 7
        %v387 = vsub.s32 3, %v386
        %v388 = vrot.slane %v206, %v387
        %v389 = vadd.f32 %v384, %v388
        %v390 = vxor.u32 %v389, 2147483648
        %v391 = vmul.f32 %v390, 1.442695
        %v392 = vpow.pop %v391
        %v393 = vadd.f32 %v392, 1.0
        %v394 = vrcp.pop %v393
        %v395 = vmul.f32 1.0, %v394
        %s396 = smul.u32 %s17, 8
        %s397 = scalar_lea.vmem %s3, %s396
        %vm398 = vcmask 7168
        %399 = vst.msk [vmem:[%s397] sm:$0xff] %vm398, %v395
        %400 = vst.msk [vmem:[#allocation2] sm:$0xff] %vm296, %v291
        %401 = vst.msk [vmem:[%s190] sm:$0xff] %vm296, %v376
        %p402 = scmp.eq.s32.totalorder %s17, 7
        // Predicated region
        $region37: #{tpu_custom_call.1} parent=31 // pred_check
          %p403 = pneg %p402
        $region38: #{tpu_custom_call.1} parent=31 // pred_check_branch
          %405 = sbr.rel (%p403) target = $region40
        $region39: #{tpu_custom_call.1} parent=31 // pred_region
          %v406 = vld [vmem:[#allocation2] sm:$0xff]
          %v407 = vld [vmem:[#allocation2 + $0x8] sm:$0xff]
          %408 = vst.msk [vmem:[#allocation3] sm:$0xff] %vm296, %v406
          %409 = vst.msk [vmem:[#allocation3 + $0x8] sm:$0xff] %vm296, %v407
        $region40: #{tpu_custom_call.1} parent=31 // pred_fallthru
          _
        // Predicated region
        $region41: #{tpu_custom_call.1} parent=31 // pred_check
          %p410 = pneg %p98
        $region42: #{tpu_custom_call.1} parent=31 // pred_check_branch
          %412 = sbr.rel (%p410) target = $region44
        $region43: #{tpu_custom_call.1} parent=31 // pred_region
          _
        $region44: #{tpu_custom_call.1} parent=31 // pred_fallthru
          _
        // Predicated region
        $region45: #{tpu_custom_call.1} parent=31 // pred_check
          %p413 = pneg %p119
        $region46: #{tpu_custom_call.1} parent=31 // pred_check_branch
          %415 = sbr.rel (%p413) target = $region48
        $region47: #{tpu_custom_call.1} parent=31 // pred_region
          %s417 = ssub.s32 256, 256
          %418 = vsyncadd [#allocation4], %s417
          %s419 = sshll.u32 [#allocation3], 4
          %s420 = int_to_ptr.vmem [resolvable:$true] %s419
          %425 = dma.vmem_to_hbm [thread:$0]  %s420, 256, %s4, [#allocation4], 128, 128, 8
        $region48: #{tpu_custom_call.1} parent=31 // pred_fallthru
          _
        // Predicated region
        $region49: #{tpu_custom_call.1} parent=31 // pred_check
          %p426 = pneg %p98
        $region50: #{tpu_custom_call.1} parent=31 // pred_check_branch
          %428 = sbr.rel (%p426) target = $region52
        $region51: #{tpu_custom_call.1} parent=31 // pred_region
          _
        $region52: #{tpu_custom_call.1} parent=31 // pred_fallthru
          _
        // Predicated region
        $region53: #{tpu_custom_call.1} parent=31 // pred_check
          %p429 = pneg %p119
        $region54: #{tpu_custom_call.1} parent=31 // pred_check_branch
          %431 = sbr.rel (%p429) target = $region56
        $region55: #{tpu_custom_call.1} parent=31 // pred_region
          %432 = dma.done [#allocation4], 256
        $region56: #{tpu_custom_call.1} parent=31 // pred_fallthru
          _
      $region32: #{tpu_custom_call.1} parent=5 // pred_fallthru
        _
      %p433 = scmp.le.s32.totalorder 2, %s12
      // Predicated region
      $region57: #{tpu_custom_call.1} parent=5 // pred_check
        %p434 = pneg %p433
      $region58: #{tpu_custom_call.1} parent=5 // pred_check_branch
        %436 = sbr.rel (%p434) target = $region60
      $region59: #{tpu_custom_call.1} parent=5 // pred_region
        %s437 = ssub.s32 %s12, 2
      $region60: #{tpu_custom_call.1} parent=5 // pred_fallthru
        _
    $region6: #{tpu_custom_call.1} parent=1 // loop_footer
      %s16 = sadd.s32 1, %s12
    $region7: #{tpu_custom_call.1} parent=1 // loop_footer_branch
      %11 = sbr.rel target = $region3
    $region8: #{tpu_custom_call.1} parent=1 // loop_exit
      _
    %438 = vsyncpa [#allocation4], 1
    %s439 = scalar_lea.sflag [#allocation4], 1
    %440 = vsyncpa %s439, 1

</llo_original>
